<compile_context>
chip_gen: v6e
topology: v6e:2x2x1
jax: 0.10.0
libtpu: 0.0.40
codegen_flags: <defaults>
</compile_context>

<pallas_src>
import functools

import jax
import jax.numpy as jnp
import numpy as np
from jax.experimental import pallas as pl
from jax.experimental.pallas import tpu as pltpu


def cnn_kernel(lhs1_ref, w1_ref, b1_ref, w2_ref, b2_ref, shift_ref,
               out_ref, *, bt, s, e):
    # lhs1_ref:  (bt*s, 5e)     im2col of the input (conv1 LHS)
    # w1_ref:    (5e, e)        fused conv1 weights    b1_ref: (1, e)
    # w2_ref:    (3e, e)        fused conv2 weights    b2_ref: (1, e)
    # shift_ref: (2*bt*s, bt*s) stacked 0/1 block-diagonal shift matrices:
    #     rows [0, n)   : (D @ h1)[r] == h1[r-1] (zero at sentence start)
    #     rows [n, 2n)  : (U @ h1)[r] == h1[r+1] (zero at sentence end)
    # out_ref:   (1, bt, e)     max-pooled output slab
    n = bt * s

    # ---- conv1: 5 taps fused into a single K = 5E matmul + bias + relu ----
    h1 = jnp.dot(lhs1_ref[...], w1_ref[...], preferred_element_type=jnp.float32)
    h1 = jnp.maximum(h1 + b1_ref[...], 0.0)                      # (n, e)

    # ---- conv2: build the im2col LHS in-kernel without pad/unaligned slices.
    # One stacked shift matmul yields both the prev-row and next-row copies;
    # the two halves are tile-aligned static slices (n is a multiple of 8).
    shifted = jnp.dot(shift_ref[...], h1,
                      preferred_element_type=jnp.float32)        # (2n, e)
    lhs2 = jnp.concatenate([shifted[:n], h1, shifted[n:]], axis=-1)  # (n, 3e)

    h2 = jnp.dot(lhs2, w2_ref[...], preferred_element_type=jnp.float32)
    h2 = jnp.maximum(h2 + b2_ref[...], 0.0)                      # (n, e)

    # ---- max pool over sent_len for every batch element in the block ----
    out_ref[0] = jnp.max(h2.reshape(bt, s, e), axis=1)           # (bt, e)


def cnn_forward(x_nchw, params, *, batch_block=None):
    """x_nchw: (B, 1, S, E) float32 -> (B, E, 1, 1) float32 (PyTorch layout)."""
    B, C, S, E = x_nchw.shape
    assert C == 1
    if batch_block is None:
        # A single grid step minimizes per-step overhead (v5e/v6e: 1 TC).
        # On v7x pass batch_block=B//2 so the two "parallel" grid steps feed
        # both TensorCores.
        batch_block = B
    assert B % batch_block == 0
    num_blocks = B // batch_block
    n_rows = batch_block * S

    xs = x_nchw[:, 0, :, :].astype(jnp.float32)                  # (B, S, E)

    # conv1 im2col, built once in the wrapper (the input is external anyway,
    # so this fuses into the producer and keeps the kernel to 3 MXU matmuls).
    xp = jnp.pad(xs, ((0, 0), (2, 2), (0, 0)))                   # (B, S+4, E)
    lhs1 = jnp.concatenate([xp[:, k:k + S, :] for k in range(5)], axis=-1)
    lhs1 = lhs1.reshape(B * S, 5 * E)                            # (B*S, 5E)

    # Repack conv weights (O, 1, K, E_in) -> (K*E_in, E_out) fused matmul RHS.
    w1c = jnp.transpose(params["w1"][:, 0, :, :], (1, 2, 0)).reshape(5 * E, E)
    w2c = jnp.transpose(params["w2"][:, 0, :, :], (1, 2, 0)).reshape(3 * E, E)
    b1 = params["b1"].reshape(1, E).astype(jnp.float32)
    b2 = params["b2"].reshape(1, E).astype(jnp.float32)

    # Constant 0/1 shift matrices (block diagonal per sentence of length S);
    # the same pattern applies to every batch block, so they are shared.
    # Stacked vertically so the kernel needs only ONE shift matmul.
    r = np.arange(n_rows)
    dmat = np.zeros((n_rows, n_rows), np.float32)
    umat = np.zeros((n_rows, n_rows), np.float32)
    rp = r[r % S != 0]
    dmat[rp, rp - 1] = 1.0                     # select previous row in sentence
    rn = r[r % S != S - 1]
    umat[rn, rn + 1] = 1.0                     # select next row in sentence
    shift = jnp.asarray(np.concatenate([dmat, umat], axis=0))    # (2n, n)

    kernel = functools.partial(cnn_kernel, bt=batch_block, s=S, e=E)

    out = pl.pallas_call(
        kernel,
        out_shape=jax.ShapeDtypeStruct((num_blocks, batch_block, E),
                                       jnp.float32),
        grid=(num_blocks,),
        in_specs=[
            pl.BlockSpec((n_rows, 5 * E), lambda i: (i, 0)),     # im2col rows
            pl.BlockSpec((5 * E, E), lambda i: (0, 0)),
            pl.BlockSpec((1, E), lambda i: (0, 0)),
            pl.BlockSpec((3 * E, E), lambda i: (0, 0)),
            pl.BlockSpec((1, E), lambda i: (0, 0)),
            pl.BlockSpec((2 * n_rows, n_rows), lambda i: (0, 0)),
        ],
        out_specs=pl.BlockSpec((1, batch_block, E), lambda i: (i, 0, 0)),
        compiler_params=pltpu.CompilerParams(
            dimension_semantics=("parallel",)),
    )(lhs1, w1c, b1, w2c, b2, shift)

    return out.reshape(B, E, 1, 1)


def reference_forward(x_nchw, params):
    """Pure-JAX reference mirroring the PyTorch module exactly."""
    y1 = jax.lax.conv_general_dilated(
        x_nchw, params["w1"], window_strides=(1, 1),
        padding=((2, 2), (0, 0)),
        dimension_numbers=("NCHW", "OIHW", "NCHW"))
    y1 = jnp.maximum(y1 + params["b1"].reshape(1, -1, 1, 1), 0.0)
    z = jnp.transpose(y1, (0, 3, 2, 1))                        # permute(0,3,2,1)
    y2 = jax.lax.conv_general_dilated(
        z, params["w2"], window_strides=(1, 1),
        padding=((1, 1), (0, 0)),
        dimension_numbers=("NCHW", "OIHW", "NCHW"))
    y2 = jnp.maximum(y2 + params["b2"].reshape(1, -1, 1, 1), 0.0)
    return jnp.max(y2, axis=2, keepdims=True)                  # max_pool2d((S,1))


def init_params(key, emb_dim):
    """Deterministic init matching PyTorch Conv2d default (uniform +-1/sqrt(fan_in))."""
    k1, k2, k3, k4 = jax.random.split(key, 4)
    bound1 = 1.0 / float(np.sqrt(1 * 5 * emb_dim))
    bound2 = 1.0 / float(np.sqrt(1 * 3 * emb_dim))
    return {
        "w1": jax.random.uniform(k1, (emb_dim, 1, 5, emb_dim), jnp.float32,
                                 -bound1, bound1),
        "b1": jax.random.uniform(k2, (emb_dim,), jnp.float32, -bound1, bound1),
        "w2": jax.random.uniform(k3, (emb_dim, 1, 3, emb_dim), jnp.float32,
                                 -bound2, bound2),
        "b2": jax.random.uniform(k4, (emb_dim,), jnp.float32, -bound2, bound2),
    }


if __name__ == "__main__":
    B, S, E = 4, 16, 32            # (batch*doc_len, sent_len, emb_dim)
    key = jax.random.PRNGKey(0)
    kx, kp = jax.random.split(key)
    params = init_params(kp, E)
    x = jax.random.normal(kx, (B, 1, S, E), jnp.float32)       # NCHW, C=1

    ref = jax.block_until_ready(reference_forward(x, params))

    # Default: whole batch in one grid step (best for v5e/v6e single TC).
    out = jax.block_until_ready(cnn_forward(x, params))
    assert out.shape == (B, E, 1, 1)
    np.testing.assert_allclose(np.asarray(out), np.asarray(ref),
                               rtol=1e-5, atol=1e-5)

    # v7x-style split: two parallel grid steps so both TensorCores get work.
    out2 = jax.block_until_ready(cnn_forward(x, params, batch_block=B // 2))
    np.testing.assert_allclose(np.asarray(out2), np.asarray(ref),
                               rtol=1e-5, atol=1e-5)

    print("KERNEL_OK")
</pallas_src>

<mosaic_0001>
module attributes {stable_mosaic.version = 11 : i64} {
  func.func @cnn_kernel(%arg0: i32, %arg1: memref<64x160xf32, #tpu.memory_space<vmem>>, %arg2: memref<160x32xf32, #tpu.memory_space<vmem>>, %arg3: memref<1x32xf32, #tpu.memory_space<vmem>>, %arg4: memref<96x32xf32, #tpu.memory_space<vmem>>, %arg5: memref<1x32xf32, #tpu.memory_space<vmem>>, %arg6: memref<128x64xf32, #tpu.memory_space<vmem>>, %arg7: memref<1x4x32xf32, #tpu.memory_space<vmem>>) attributes {dimension_semantics = [#tpu.dimension_semantics<parallel>], iteration_bounds = array<i64: 1>, scalar_prefetch = 0 : i64, scratch_operands = 0 : i64, tpu.core_type = #tpu.core_type<tc>, window_params = [{transform_indices = @transform_0, window_bounds = array<i64: 64, 160>}, {pipeline_mode = #tpu.pipeline_mode<synchronous>, transform_indices = @transform_1, window_bounds = array<i64: 160, 32>}, {pipeline_mode = #tpu.pipeline_mode<synchronous>, transform_indices = @transform_2, window_bounds = array<i64: 1, 32>}, {pipeline_mode = #tpu.pipeline_mode<synchronous>, transform_indices = @transform_3, window_bounds = array<i64: 96, 32>}, {pipeline_mode = #tpu.pipeline_mode<synchronous>, transform_indices = @transform_4, window_bounds = array<i64: 1, 32>}, {pipeline_mode = #tpu.pipeline_mode<synchronous>, transform_indices = @transform_5, window_bounds = array<i64: 128, 64>}, {transform_indices = @transform_6, window_bounds = array<i64: 1, 4, 32>}]} {
    %c0 = arith.constant 0 : index
    %c0_0 = arith.constant 0 : index
    %0 = vector.load %arg1[%c0, %c0_0] : memref<64x160xf32, #tpu.memory_space<vmem>>, vector<64x160xf32>
    %c0_1 = arith.constant 0 : index
    %c0_2 = arith.constant 0 : index
    %1 = vector.load %arg2[%c0_1, %c0_2] : memref<160x32xf32, #tpu.memory_space<vmem>>, vector<160x32xf32>
    %cst = arith.constant dense<0.000000e+00> : vector<64x32xf32>
    %2 = tpu.matmul %0, %1, %cst {dimension_numbers = #tpu.dot_dimension_numbers<[1], [0], [0], [1], [0, 0, 1, 1], [], []>} : vector<64x160xf32>, vector<160x32xf32>, vector<64x32xf32> -> vector<64x32xf32>
    %c0_3 = arith.constant 0 : index
    %c0_4 = arith.constant 0 : index
    %3 = vector.load %arg3[%c0_3, %c0_4] : memref<1x32xf32, #tpu.memory_space<vmem>>, vector<1x32xf32>
    %4 = vector.broadcast %3 : vector<1x32xf32> to vector<64x32xf32>
    %5 = arith.addf %2, %4 : vector<64x32xf32>
    %cst_5 = arith.constant 0.000000e+00 : f32
    %6 = vector.broadcast %cst_5 : f32 to vector<64x32xf32>
    %7 = arith.maximumf %5, %6 : vector<64x32xf32>
    %c0_6 = arith.constant 0 : index
    %c0_7 = arith.constant 0 : index
    %8 = vector.load %arg6[%c0_6, %c0_7] : memref<128x64xf32, #tpu.memory_space<vmem>>, vector<128x64xf32>
    %cst_8 = arith.constant dense<0.000000e+00> : vector<128x32xf32>
    %9 = tpu.matmul %8, %7, %cst_8 {dimension_numbers = #tpu.dot_dimension_numbers<[1], [0], [0], [1], [0, 0, 1, 1], [], []>} : vector<128x64xf32>, vector<64x32xf32>, vector<128x32xf32> -> vector<128x32xf32>
    %10 = vector.extract_strided_slice %9 {offsets = [0, 0], sizes = [64, 32], strides = [1, 1]} : vector<128x32xf32> to vector<64x32xf32>
    %11 = vector.extract_strided_slice %9 {offsets = [64, 0], sizes = [64, 32], strides = [1, 1]} : vector<128x32xf32> to vector<64x32xf32>
    %12 = tpu.concatenate %10, %7, %11 in 1 : vector<64x32xf32>, vector<64x32xf32>, vector<64x32xf32> -> vector<64x96xf32>
    %c0_9 = arith.constant 0 : index
    %c0_10 = arith.constant 0 : index
    %13 = vector.load %arg4[%c0_9, %c0_10] : memref<96x32xf32, #tpu.memory_space<vmem>>, vector<96x32xf32>
    %cst_11 = arith.constant dense<0.000000e+00> : vector<64x32xf32>
    %14 = tpu.matmul %12, %13, %cst_11 {dimension_numbers = #tpu.dot_dimension_numbers<[1], [0], [0], [1], [0, 0, 1, 1], [], []>} : vector<64x96xf32>, vector<96x32xf32>, vector<64x32xf32> -> vector<64x32xf32>
    %c0_12 = arith.constant 0 : index
    %c0_13 = arith.constant 0 : index
    %15 = vector.load %arg5[%c0_12, %c0_13] : memref<1x32xf32, #tpu.memory_space<vmem>>, vector<1x32xf32>
    %16 = vector.broadcast %15 : vector<1x32xf32> to vector<64x32xf32>
    %17 = arith.addf %14, %16 : vector<64x32xf32>
    %cst_14 = arith.constant 0.000000e+00 : f32
    %18 = vector.broadcast %cst_14 : f32 to vector<64x32xf32>
    %19 = arith.maximumf %17, %18 : vector<64x32xf32>
    %20 = vector.shape_cast %19 : vector<64x32xf32> to vector<4x16x32xf32>
    %cst_15 = arith.constant dense<0xFF800000> : vector<4x32xf32>
    %21 = vector.multi_reduction <maximumf>, %20, %cst_15 [1] : vector<4x16x32xf32> to vector<4x32xf32>
    %c0_16 = arith.constant 0 : index
    %c0_17 = arith.constant 0 : index
    %c0_18 = arith.constant 0 : index
    %22 = vector.load %arg7[%c0_16, %c0_17, %c0_18] : memref<1x4x32xf32, #tpu.memory_space<vmem>>, vector<1x4x32xf32>
    %23 = vector.shape_cast %22 : vector<1x4x32xf32> to vector<4x32xf32>
    %24 = vector.shape_cast %21 : vector<4x32xf32> to vector<1x4x32xf32>
    tpu.vector_store %arg7[%c0_16, %c0_17, %c0_18], %24 {strides = array<i32>} : memref<1x4x32xf32, #tpu.memory_space<vmem>>, vector<1x4x32xf32>,
    return
  }
  func.func @transform_0(%arg0: i32) -> (i32, i32) {
    %c0_i32 = arith.constant 0 : i32
    %c0_i32_0 = arith.constant 0 : i32
    return %arg0, %c0_i32 : i32, i32
  }
  func.func @transform_1(%arg0: i32) -> (i32, i32) {
    %c0_i32 = arith.constant 0 : i32
    %c0_i32_0 = arith.constant 0 : i32
    %c0_i32_1 = arith.constant 0 : i32
    return %c0_i32, %c0_i32_0 : i32, i32
  }
  func.func @transform_2(%arg0: i32) -> (i32, i32) {
    %c0_i32 = arith.constant 0 : i32
    %c0_i32_0 = arith.constant 0 : i32
    %c0_i32_1 = arith.constant 0 : i32
    return %c0_i32, %c0_i32_0 : i32, i32
  }
  func.func @transform_3(%arg0: i32) -> (i32, i32) {
    %c0_i32 = arith.constant 0 : i32
    %c0_i32_0 = arith.constant 0 : i32
    %c0_i32_1 = arith.constant 0 : i32
    return %c0_i32, %c0_i32_0 : i32, i32
  }
  func.func @transform_4(%arg0: i32) -> (i32, i32) {
    %c0_i32 = arith.constant 0 : i32
    %c0_i32_0 = arith.constant 0 : i32
    %c0_i32_1 = arith.constant 0 : i32
    return %c0_i32, %c0_i32_0 : i32, i32
  }
  func.func @transform_5(%arg0: i32) -> (i32, i32) {
    %c0_i32 = arith.constant 0 : i32
    %c0_i32_0 = arith.constant 0 : i32
    %c0_i32_1 = arith.constant 0 : i32
    return %c0_i32, %c0_i32_0 : i32, i32
  }
  func.func @transform_6(%arg0: i32) -> (i32, i32, i32) {
    %c0_i32 = arith.constant 0 : i32
    %c0_i32_0 = arith.constant 0 : i32
    %c0_i32_1 = arith.constant 0 : i32
    return %arg0, %c0_i32, %c0_i32_0 : i32, i32, i32
  }
}

</mosaic_0001>

<llo_original>
// kernel: tpu_custom_call.1
$region0: #{tpu_custom_call.1}
  #allocation0 [shape = 'u32[]', space=smem, size = 0x4, offset = 0x4, fixed_abs, tag = 'smem constant byte address 0x4 - core index']
  #allocation1 [shape = 'u32[144,128]{1,0:T(1,128)}', space=vmem, size = 0x12000, scoped, tag = 'internal scratch']
  %s0 = inlined_call_operand.vmem [shape: f32[64,160], index: 0, kind: input, shape index: {}]
  %s1 = inlined_call_operand.vmem [shape: f32[160,32], index: 1, kind: input, shape index: {}]
  %s2 = inlined_call_operand.vmem [shape: f32[1,32], index: 2, kind: input, shape index: {}]
  %s3 = inlined_call_operand.vmem [shape: f32[96,32], index: 3, kind: input, shape index: {}]
  %s4 = inlined_call_operand.vmem [shape: f32[1,32], index: 4, kind: input, shape index: {}]
  %s5 = inlined_call_operand.vmem [shape: f32[128,64], index: 5, kind: input, shape index: {}]
  %s6 = inlined_call_operand.hbm [shape: f32[1,4,32], index: 6, kind: output, shape index: {}]
  %s7 = sld [smem:[#allocation0]]
  $region34: #{tpu_custom_call.1} parent=0
    _
  %s9 = ssub.s32 1, %s7
  %s10 = scalar_select 0, %s9, %s7
  $region1: #{tpu_custom_call.1} parent=0
    #allocation2 [shape = 'u8[2048]{0}', space=vmem, size = 0x800, scoped, tag = 'output window, operand 0, single buffered']
    #allocation3 [shape = 's32[1]{0}', space=sflag, size = 0x4, scoped, tag = 'scoped memory for tpu_custom_call.1']
    %11 = vsyncpa [#allocation3], 0
    // Predicated region
    $region2: #{tpu_custom_call.1} parent=1 // pred_check
      _
    $region3: #{tpu_custom_call.1} parent=1 // pred_check_branch
      %13 = sbr.rel (0) target = $region5
    $region4: #{tpu_custom_call.1} parent=1 // pred_region
      _
    $region5: #{tpu_custom_call.1} parent=1 // pred_fallthru
      _
    // Predicated region
    $region6: #{tpu_custom_call.1} parent=1 // pred_check
      _
    $region7: #{tpu_custom_call.1} parent=1 // pred_check_branch
      %15 = sbr.rel (0) target = $region9
    $region8: #{tpu_custom_call.1} parent=1 // pred_region
      _
    $region9: #{tpu_custom_call.1} parent=1 // pred_fallthru
      _
    // Predicated region
    $region10: #{tpu_custom_call.1} parent=1 // pred_check
      _
    $region11: #{tpu_custom_call.1} parent=1 // pred_check_branch
      %17 = sbr.rel (0) target = $region13
    $region12: #{tpu_custom_call.1} parent=1 // pred_region
      _
    $region13: #{tpu_custom_call.1} parent=1 // pred_fallthru
      _
    // Predicated region
    $region14: #{tpu_custom_call.1} parent=1 // pred_check
      _
    $region15: #{tpu_custom_call.1} parent=1 // pred_check_branch
      %19 = sbr.rel (0) target = $region17
    $region16: #{tpu_custom_call.1} parent=1 // pred_region
      _
    $region17: #{tpu_custom_call.1} parent=1 // pred_fallthru
      _
    // Predicated region
    $region18: #{tpu_custom_call.1} parent=1 // pred_check
      _
    $region19: #{tpu_custom_call.1} parent=1 // pred_check_branch
      %21 = sbr.rel (0) target = $region21
    $region20: #{tpu_custom_call.1} parent=1 // pred_region
      _
    $region21: #{tpu_custom_call.1} parent=1 // pred_fallthru
      _
    // Predicated region
    $region22: #{tpu_custom_call.1} parent=1 // pred_check
      _
    $region23: #{tpu_custom_call.1} parent=1 // pred_check_branch
      %23 = sbr.rel (0) target = $region25
    $region24: #{tpu_custom_call.1} parent=1 // pred_region
      _
    $region25: #{tpu_custom_call.1} parent=1 // pred_fallthru
      _
    %v24 = vld [vmem:[%s0] sm:$0xff]
    %v25 = vld [vmem:[%s0 + $0x8] sm:$0xff]
    %v26 = vld [vmem:[%s0 + $0x10] sm:$0xff]
    %v27 = vld [vmem:[%s0 + $0x18] sm:$0xff]
    %v28 = vld [vmem:[%s0 + $0x20] sm:$0xff]
    %v29 = vld [vmem:[%s0 + $0x28] sm:$0xff]
    %v30 = vld [vmem:[%s0 + $0x30] sm:$0xff]
    %v31 = vld [vmem:[%s0 + $0x38] sm:$0xff]
    %v32 = vld [vmem:[%s0 + $0x40] sm:$0xff]
    %v33 = vld [vmem:[%s0 + $0x48] sm:$0xff]
    %v34 = vld [vmem:[%s0 + $0x50] sm:$0xff]
    %v35 = vld [vmem:[%s0 + $0x58] sm:$0xff]
    %v36 = vld [vmem:[%s0 + $0x60] sm:$0xff]
    %v37 = vld [vmem:[%s0 + $0x68] sm:$0xff]
    %v38 = vld [vmem:[%s0 + $0x70] sm:$0xff]
    %v39 = vld [vmem:[%s0 + $0x78] sm:$0xff]
    %v40 = vld [vmem:[%s1] sm:$0xff]
    %v41 = vld [vmem:[%s1 + $0x8] sm:$0xff]
    %v42 = vld [vmem:[%s1 + $0x10] sm:$0xff]
    %v43 = vld [vmem:[%s1 + $0x18] sm:$0xff]
    %v44 = vld [vmem:[%s1 + $0x20] sm:$0xff]
    %v45 = vld [vmem:[%s1 + $0x28] sm:$0xff]
    %v46 = vld [vmem:[%s1 + $0x30] sm:$0xff]
    %v47 = vld [vmem:[%s1 + $0x38] sm:$0xff]
    %v48 = vld [vmem:[%s1 + $0x40] sm:$0xff]
    %v49 = vld [vmem:[%s1 + $0x48] sm:$0xff]
    %v50 = vld [vmem:[%s1 + $0x50] sm:$0xff]
    %v51 = vld [vmem:[%s1 + $0x58] sm:$0xff]
    %v52 = vld [vmem:[%s1 + $0x60] sm:$0xff]
    %v53 = vld [vmem:[%s1 + $0x68] sm:$0xff]
    %v54 = vld [vmem:[%s1 + $0x70] sm:$0xff]
    %v55 = vld [vmem:[%s1 + $0x78] sm:$0xff]
    %v56 = vld [vmem:[%s1 + $0x80] sm:$0xff]
    %v57 = vld [vmem:[%s1 + $0x88] sm:$0xff]
    %v58 = vld [vmem:[%s1 + $0x90] sm:$0xff]
    %v59 = vld [vmem:[%s1 + $0x98] sm:$0xff]
    %v60 = vld [vmem:[%s2] sm:$0x1]
    %v62 = vlaneseq
    %v63 = vshrl.u32 %v62, 7
    %v64 = vsub.s32 0, %v63
    %v65 = vrot.slane %v60, %v64
    %vm67 = vcmask 261120
    %v69 = vsel %vm67, %v25, 0
    %v72 = vsel %vm67, %v27, 0
    %v75 = vsel %vm67, %v29, 0
    %v78 = vsel %vm67, %v31, 0
    %v81 = vsel %vm67, %v33, 0
    %v84 = vsel %vm67, %v35, 0
    %v87 = vsel %vm67, %v37, 0
    %v90 = vsel %vm67, %v39, 0
    %92 = vmatprep.subr.mxu0 0.0
    %93 = vmatpush1.msra.mxu0 %v55
    %94 = vmatprep.subr.mxu0 0.0
    %95 = vmatpush1.msra.mxu0 %v54
    %96 = vmatprep.subr.mxu0 0.0
    %97 = vmatpush1.msra.mxu0 %v53
    %98 = vmatprep.subr.mxu0 0.0
    %99 = vmatpush1.msra.mxu0 %v52
    %100 = vmatprep.subr.mxu0 0.0
    %101 = vmatpush1.msra.mxu0 %v51
    %102 = vmatprep.subr.mxu0 0.0
    %103 = vmatpush1.msra.mxu0 %v50
    %104 = vmatprep.subr.mxu0 0.0
    %105 = vmatpush1.msra.mxu0 %v49
    %106 = vmatprep.subr.mxu0 0.0
    %107 = vmatpush1.msra.mxu0 %v48
    %108 = vmatprep.subr.mxu0 0.0
    %109 = vmatpush1.msra.mxu0 %v47
    %110 = vmatprep.subr.mxu0 0.0
    %111 = vmatpush1.msra.mxu0 %v46
    %112 = vmatprep.subr.mxu0 0.0
    %113 = vmatpush1.msra.mxu0 %v45
    %114 = vmatprep.subr.mxu0 0.0
    %115 = vmatpush1.msra.mxu0 %v44
    %116 = vmatprep.subr.mxu0 0.0
    %117 = vmatpush1.msra.mxu0 %v43
    %118 = vmatprep.subr.mxu0 0.0
    %119 = vmatpush1.msra.mxu0 %v42
    %120 = vmatprep.subr.mxu0 0.0
    %121 = vmatpush1.msra.mxu0 %v41
    %122 = vmatprep.subr.mxu0 0.0
    %123 = vmatpush1.msra.mxu0 %v40
    %124 = vmatprep.subr.mxu0 0.0
    %125 = vmatpush2.msra.mxu0 0.0
    %126 = vmatprep.subr.mxu0 0.0
    %127 = vmatpush2.msra.mxu0 0.0
    %128 = vmatprep.subr.mxu0 0.0
    %129 = vmatpush2.msra.mxu0 0.0
    %130 = vmatprep.subr.mxu0 0.0
    %131 = vmatpush2.msra.mxu0 0.0
    %132 = vmatprep.subr.mxu0 0.0
    %133 = vmatpush2.msra.mxu0 0.0
    %134 = vmatprep.subr.mxu0 0.0
    %135 = vmatpush2.msra.mxu0 0.0
    %136 = vmatprep.subr.mxu0 0.0
    %137 = vmatpush2.msra.mxu0 0.0
    %138 = vmatprep.subr.mxu0 0.0
    %139 = vmatpush2.msra.mxu0 0.0
    %140 = vmatprep.subr.mxu0 0.0
    %141 = vmatpush2.msra.mxu0 0.0
    %142 = vmatprep.subr.mxu0 0.0
    %143 = vmatpush2.msra.mxu0 0.0
    %144 = vmatprep.subr.mxu0 0.0
    %145 = vmatpush2.msra.mxu0 0.0
    %146 = vmatprep.subr.mxu0 0.0
    %147 = vmatpush2.msra.mxu0 0.0
    %148 = vmatprep.subr.mxu0 0.0
    %149 = vmatpush2.msra.mxu0 %v59
    %150 = vmatprep.subr.mxu0 0.0
    %151 = vmatpush2.msra.mxu0 %v58
    %152 = vmatprep.subr.mxu0 0.0
    %153 = vmatpush2.msra.mxu0 %v57
    %154 = vmatprep.subr.mxu0 0.0
    %155 = vmatpush2.msra.mxu0 %v56
    %156 = vmatprep.mubr.f32.mxu0 %v69
    %157 = vmatmul.mubr.f32.gmra.mxu0 %v24
    %v158 = vpop.f32.mrf.mxu0
    %v159 = vadd.f32 %v65, %v158
    %v160 = vpop.f32.mrf.mxu0
    %161 = vmatprep.mubr.f32.mxu0 %v72
    %162 = vmatmul.mubr.f32.gmra.mxu0 %v26
    %v163 = vpop.f32.mrf.mxu0
    %v164 = vadd.f32 %v65, %v163
    %v165 = vpop.f32.mrf.mxu0
    %166 = vmatprep.mubr.f32.mxu0 %v75
    %167 = vmatmul.mubr.f32.gmra.mxu0 %v28
    %v168 = vpop.f32.mrf.mxu0
    %v169 = vadd.f32 %v65, %v168
    %v170 = vpop.f32.mrf.mxu0
    %171 = vmatprep.mubr.f32.mxu0 %v78
    %172 = vmatmul.mubr.f32.gmra.mxu0 %v30
    %v173 = vpop.f32.mrf.mxu0
    %v174 = vadd.f32 %v65, %v173
    %v175 = vpop.f32.mrf.mxu0
    %176 = vmatprep.mubr.f32.mxu0 %v81
    %177 = vmatmul.mubr.f32.gmra.mxu0 %v32
    %v178 = vpop.f32.mrf.mxu0
    %v179 = vadd.f32 %v65, %v178
    %v180 = vpop.f32.mrf.mxu0
    %181 = vmatprep.mubr.f32.mxu0 %v84
    %182 = vmatmul.mubr.f32.gmra.mxu0 %v34
    %v183 = vpop.f32.mrf.mxu0
    %v184 = vadd.f32 %v65, %v183
    %v185 = vpop.f32.mrf.mxu0
    %186 = vmatprep.mubr.f32.mxu0 %v87
    %187 = vmatmul.mubr.f32.gmra.mxu0 %v36
    %v188 = vpop.f32.mrf.mxu0
    %v189 = vadd.f32 %v65, %v188
    %v190 = vpop.f32.mrf.mxu0
    %191 = vmatprep.mubr.f32.mxu0 %v90
    %192 = vmatmul.mubr.f32.gmra.mxu0 %v38
    %v193 = vpop.f32.mrf.mxu0
    %v194 = vadd.f32 %v65, %v193
    %v195 = vpop.f32.mrf.mxu0
    %196 = vdwg.mxu0
    %v197 = vmax.f32 %v159, 0.0
    %v198 = vmax.f32 %v164, 0.0
    %v199 = vmax.f32 %v169, 0.0
    %v200 = vmax.f32 %v174, 0.0
    %v201 = vmax.f32 %v179, 0.0
    %v202 = vmax.f32 %v184, 0.0
    %v203 = vmax.f32 %v189, 0.0
    %v204 = vmax.f32 %v194, 0.0
    %v205 = vld [vmem:[%s5] sm:$0xff]
    %v206 = vld [vmem:[%s5 + $0x8] sm:$0xff]
    %v207 = vld [vmem:[%s5 + $0x10] sm:$0xff]
    %v208 = vld [vmem:[%s5 + $0x18] sm:$0xff]
    %v209 = vld [vmem:[%s5 + $0x20] sm:$0xff]
    %v210 = vld [vmem:[%s5 + $0x28] sm:$0xff]
    %v211 = vld [vmem:[%s5 + $0x30] sm:$0xff]
    %v212 = vld [vmem:[%s5 + $0x38] sm:$0xff]
    %v213 = vld [vmem:[%s5 + $0x40] sm:$0xff]
    %v214 = vld [vmem:[%s5 + $0x48] sm:$0xff]
    %v215 = vld [vmem:[%s5 + $0x50] sm:$0xff]
    %v216 = vld [vmem:[%s5 + $0x58] sm:$0xff]
    %v217 = vld [vmem:[%s5 + $0x60] sm:$0xff]
    %v218 = vld [vmem:[%s5 + $0x68] sm:$0xff]
    %v219 = vld [vmem:[%s5 + $0x70] sm:$0xff]
    %v220 = vld [vmem:[%s5 + $0x78] sm:$0xff]
    %vm221 = vcmask 523264
    %v223 = vsel %vm221, %v205, 0
    %v226 = vsel %vm221, %v206, 0
    %v229 = vsel %vm221, %v207, 0
    %v232 = vsel %vm221, %v208, 0
    %v235 = vsel %vm221, %v209, 0
    %v238 = vsel %vm221, %v210, 0
    %v241 = vsel %vm221, %v211, 0
    %v244 = vsel %vm221, %v212, 0
    %v247 = vsel %vm221, %v213, 0
    %v250 = vsel %vm221, %v214, 0
    %v253 = vsel %vm221, %v215, 0
    %v256 = vsel %vm221, %v216, 0
    %v259 = vsel %vm221, %v217, 0
    %v262 = vsel %vm221, %v218, 0
    %v265 = vsel %vm221, %v219, 0
    %v268 = vsel %vm221, %v220, 0
    %270 = vmatprep.subr.mxu0 0.0
    %271 = vmatpush1.msra.mxu0 0.0
    %272 = vmatprep.subr.mxu0 0.0
    %273 = vmatpush1.msra.mxu0 0.0
    %274 = vmatprep.subr.mxu0 0.0
    %275 = vmatpush1.msra.mxu0 0.0
    %276 = vmatprep.subr.mxu0 0.0
    %277 = vmatpush1.msra.mxu0 0.0
    %278 = vmatprep.subr.mxu0 0.0
    %279 = vmatpush1.msra.mxu0 0.0
    %280 = vmatprep.subr.mxu0 0.0
    %281 = vmatpush1.msra.mxu0 0.0
    %282 = vmatprep.subr.mxu0 0.0
    %283 = vmatpush1.msra.mxu0 0.0
    %284 = vmatprep.subr.mxu0 0.0
    %285 = vmatpush1.msra.mxu0 0.0
    %286 = vmatprep.subr.mxu0 0.0
    %287 = vmatpush1.msra.mxu0 %v204
    %288 = vmatprep.subr.mxu0 0.0
    %289 = vmatpush1.msra.mxu0 %v203
    %290 = vmatprep.subr.mxu0 0.0
    %291 = vmatpush1.msra.mxu0 %v202
    %292 = vmatprep.subr.mxu0 0.0
    %293 = vmatpush1.msra.mxu0 %v201
    %294 = vmatprep.subr.mxu0 0.0
    %295 = vmatpush1.msra.mxu0 %v200
    %296 = vmatprep.subr.mxu0 0.0
    %297 = vmatpush1.msra.mxu0 %v199
    %298 = vmatprep.subr.mxu0 0.0
    %299 = vmatpush1.msra.mxu0 %v198
    %300 = vmatprep.subr.mxu0 0.0
    %301 = vmatpush1.msra.mxu0 %v197
    %302 = vmatprep.subr.mxu0 0.0
    %303 = vmatpush2.msra.mxu0 0.0
    %304 = vmatprep.subr.mxu0 0.0
    %305 = vmatpush2.msra.mxu0 0.0
    %306 = vmatprep.subr.mxu0 0.0
    %307 = vmatpush2.msra.mxu0 0.0
    %308 = vmatprep.subr.mxu0 0.0
    %309 = vmatpush2.msra.mxu0 0.0
    %310 = vmatprep.subr.mxu0 0.0
    %311 = vmatpush2.msra.mxu0 0.0
    %312 = vmatprep.subr.mxu0 0.0
    %313 = vmatpush2.msra.mxu0 0.0
    %314 = vmatprep.subr.mxu0 0.0
    %315 = vmatpush2.msra.mxu0 0.0
    %316 = vmatprep.subr.mxu0 0.0
    %317 = vmatpush2.msra.mxu0 0.0
    %318 = vmatprep.subr.mxu0 0.0
    %319 = vmatpush2.msra.mxu0 0.0
    %320 = vmatprep.subr.mxu0 0.0
    %321 = vmatpush2.msra.mxu0 0.0
    %322 = vmatprep.subr.mxu0 0.0
    %323 = vmatpush2.msra.mxu0 0.0
    %324 = vmatprep.subr.mxu0 0.0
    %325 = vmatpush2.msra.mxu0 0.0
    %326 = vmatprep.subr.mxu0 0.0
    %327 = vmatpush2.msra.mxu0 0.0
    %328 = vmatprep.subr.mxu0 0.0
    %329 = vmatpush2.msra.mxu0 0.0
    %330 = vmatprep.subr.mxu0 0.0
    %331 = vmatpush2.msra.mxu0 0.0
    %332 = vmatprep.subr.mxu0 0.0
    %333 = vmatpush2.msra.mxu0 0.0
    %334 = vmatprep.mubr.f32.mxu0 0.0
    %335 = vmatmul.mubr.f32.gmra.mxu0 %v223
    %v336 = vpop.f32.mrf.mxu0
    %v337 = vadd.f32 0.0, %v336
    %v338 = vpop.f32.mrf.mxu0
    %339 = vmatprep.mubr.f32.mxu0 0.0
    %340 = vmatmul.mubr.f32.gmra.mxu0 %v226
    %v341 = vpop.f32.mrf.mxu0
    %v342 = vadd.f32 0.0, %v341
    %v343 = vpop.f32.mrf.mxu0
    %344 = vmatprep.mubr.f32.mxu0 0.0
    %345 = vmatmul.mubr.f32.gmra.mxu0 %v229
    %v346 = vpop.f32.mrf.mxu0
    %v347 = vadd.f32 0.0, %v346
    %v348 = vpop.f32.mrf.mxu0
    %349 = vmatprep.mubr.f32.mxu0 0.0
    %350 = vmatmul.mubr.f32.gmra.mxu0 %v232
    %v351 = vpop.f32.mrf.mxu0
    %v352 = vadd.f32 0.0, %v351
    %v353 = vpop.f32.mrf.mxu0
    %354 = vmatprep.mubr.f32.mxu0 0.0
    %355 = vmatmul.mubr.f32.gmra.mxu0 %v235
    %v356 = vpop.f32.mrf.mxu0
    %v357 = vadd.f32 0.0, %v356
    %v358 = vpop.f32.mrf.mxu0
    %359 = vmatprep.mubr.f32.mxu0 0.0
    %360 = vmatmul.mubr.f32.gmra.mxu0 %v238
    %v361 = vpop.f32.mrf.mxu0
    %v362 = vadd.f32 0.0, %v361
    %v363 = vpop.f32.mrf.mxu0
    %364 = vmatprep.mubr.f32.mxu0 0.0
    %365 = vmatmul.mubr.f32.gmra.mxu0 %v241
    %v366 = vpop.f32.mrf.mxu0
    %v367 = vadd.f32 0.0, %v366
    %v368 = vpop.f32.mrf.mxu0
    %369 = vmatprep.mubr.f32.mxu0 0.0
    %370 = vmatmul.mubr.f32.gmra.mxu0 %v244
    %v371 = vpop.f32.mrf.mxu0
    %v372 = vadd.f32 0.0, %v371
    %v373 = vpop.f32.mrf.mxu0
    %374 = vmatprep.mubr.f32.mxu0 0.0
    %375 = vmatmul.mubr.f32.gmra.mxu0 %v247
    %v376 = vpop.f32.mrf.mxu0
    %v377 = vadd.f32 0.0, %v376
    %v378 = vpop.f32.mrf.mxu0
    %379 = vmatprep.mubr.f32.mxu0 0.0
    %380 = vmatmul.mubr.f32.gmra.mxu0 %v250
    %v381 = vpop.f32.mrf.mxu0
    %v382 = vadd.f32 0.0, %v381
    %v383 = vpop.f32.mrf.mxu0
    %384 = vmatprep.mubr.f32.mxu0 0.0
    %385 = vmatmul.mubr.f32.gmra.mxu0 %v253
    %v386 = vpop.f32.mrf.mxu0
    %v387 = vadd.f32 0.0, %v386
    %v388 = vpop.f32.mrf.mxu0
    %389 = vmatprep.mubr.f32.mxu0 0.0
    %390 = vmatmul.mubr.f32.gmra.mxu0 %v256
    %v391 = vpop.f32.mrf.mxu0
    %v392 = vadd.f32 0.0, %v391
    %v393 = vpop.f32.mrf.mxu0
    %394 = vmatprep.mubr.f32.mxu0 0.0
    %395 = vmatmul.mubr.f32.gmra.mxu0 %v259
    %v396 = vpop.f32.mrf.mxu0
    %v397 = vadd.f32 0.0, %v396
    %v398 = vpop.f32.mrf.mxu0
    %399 = vmatprep.mubr.f32.mxu0 0.0
    %400 = vmatmul.mubr.f32.gmra.mxu0 %v262
    %v401 = vpop.f32.mrf.mxu0
    %v402 = vadd.f32 0.0, %v401
    %v403 = vpop.f32.mrf.mxu0
    %404 = vmatprep.mubr.f32.mxu0 0.0
    %405 = vmatmul.mubr.f32.gmra.mxu0 %v265
    %v406 = vpop.f32.mrf.mxu0
    %v407 = vadd.f32 0.0, %v406
    %v408 = vpop.f32.mrf.mxu0
    %409 = vmatprep.mubr.f32.mxu0 0.0
    %410 = vmatmul.mubr.f32.gmra.mxu0 %v268
    %v411 = vpop.f32.mrf.mxu0
    %v412 = vadd.f32 0.0, %v411
    %v413 = vpop.f32.mrf.mxu0
    %414 = vdwg.mxu0
    %423 = vrot.lane.b32.xlu0 %v197, 32
    %v424 = vpop.permute.xlu0 %423
    %425 = vrot.lane.b32.xlu0 %v198, 32
    %v426 = vpop.permute.xlu0 %425
    %427 = vrot.lane.b32.xlu0 %v199, 32
    %v428 = vpop.permute.xlu0 %427
    %429 = vrot.lane.b32.xlu0 %v200, 32
    %v430 = vpop.permute.xlu0 %429
    %431 = vrot.lane.b32.xlu0 %v201, 32
    %v432 = vpop.permute.xlu0 %431
    %433 = vrot.lane.b32.xlu0 %v202, 32
    %v434 = vpop.permute.xlu0 %433
    %435 = vrot.lane.b32.xlu0 %v203, 32
    %v436 = vpop.permute.xlu0 %435
    %437 = vrot.lane.b32.xlu0 %v204, 32
    %v438 = vpop.permute.xlu0 %437
    %455 = vrot.lane.b32.xlu0 %v377, 64
    %v456 = vpop.permute.xlu0 %455
    %457 = vrot.lane.b32.xlu0 %v382, 64
    %v458 = vpop.permute.xlu0 %457
    %459 = vrot.lane.b32.xlu0 %v387, 64
    %v460 = vpop.permute.xlu0 %459
    %461 = vrot.lane.b32.xlu0 %v392, 64
    %v462 = vpop.permute.xlu0 %461
    %463 = vrot.lane.b32.xlu0 %v397, 64
    %v464 = vpop.permute.xlu0 %463
    %465 = vrot.lane.b32.xlu0 %v402, 64
    %v466 = vpop.permute.xlu0 %465
    %467 = vrot.lane.b32.xlu0 %v407, 64
    %v468 = vpop.permute.xlu0 %467
    %469 = vrot.lane.b32.xlu0 %v412, 64
    %v470 = vpop.permute.xlu0 %469
    %v479 = vsel %vm67, %v337, %v424
    %v480 = vsel %vm67, %v342, %v426
    %v481 = vsel %vm67, %v347, %v428
    %v482 = vsel %vm67, %v352, %v430
    %v483 = vsel %vm67, %v357, %v432
    %v484 = vsel %vm67, %v362, %v434
    %v485 = vsel %vm67, %v367, %v436
    %v486 = vsel %vm67, %v372, %v438
    %v487 = vsel %vm221, %v479, %v456
    %v488 = vsel %vm221, %v480, %v458
    %v489 = vsel %vm221, %v481, %v460
    %v490 = vsel %vm221, %v482, %v462
    %v491 = vsel %vm221, %v483, %v464
    %v492 = vsel %vm221, %v484, %v466
    %v493 = vsel %vm221, %v485, %v468
    %v494 = vsel %vm221, %v486, %v470
    %v495 = vld [vmem:[%s3] sm:$0xff]
    %v496 = vld [vmem:[%s3 + $0x8] sm:$0xff]
    %v497 = vld [vmem:[%s3 + $0x10] sm:$0xff]
    %v498 = vld [vmem:[%s3 + $0x18] sm:$0xff]
    %v499 = vld [vmem:[%s3 + $0x20] sm:$0xff]
    %v500 = vld [vmem:[%s3 + $0x28] sm:$0xff]
    %v501 = vld [vmem:[%s3 + $0x30] sm:$0xff]
    %v502 = vld [vmem:[%s3 + $0x38] sm:$0xff]
    %v503 = vld [vmem:[%s3 + $0x40] sm:$0xff]
    %v504 = vld [vmem:[%s3 + $0x48] sm:$0xff]
    %v505 = vld [vmem:[%s3 + $0x50] sm:$0xff]
    %v506 = vld [vmem:[%s3 + $0x58] sm:$0xff]
    %v507 = vld [vmem:[%s4] sm:$0x1]
    %v509 = vlaneseq
    %v510 = vshrl.u32 %v509, 7
    %v511 = vsub.s32 0, %v510
    %v512 = vrot.slane %v507, %v511
    %vm514 = vcmask 785408
    %v516 = vsel %vm514, %v487, 0
    %v519 = vsel %vm514, %v488, 0
    %v522 = vsel %vm514, %v489, 0
    %v525 = vsel %vm514, %v490, 0
    %v528 = vsel %vm514, %v491, 0
    %v531 = vsel %vm514, %v492, 0
    %v534 = vsel %vm514, %v493, 0
    %v537 = vsel %vm514, %v494, 0
    %539 = vmatprep.subr.mxu0 0.0
    %540 = vmatpush1.msra.mxu0 0.0
    %541 = vmatprep.subr.mxu0 0.0
    %542 = vmatpush1.msra.mxu0 0.0
    %543 = vmatprep.subr.mxu0 0.0
    %544 = vmatpush1.msra.mxu0 0.0
    %545 = vmatprep.subr.mxu0 0.0
    %546 = vmatpush1.msra.mxu0 0.0
    %547 = vmatprep.subr.mxu0 0.0
    %548 = vmatpush1.msra.mxu0 %v506
    %549 = vmatprep.subr.mxu0 0.0
    %550 = vmatpush1.msra.mxu0 %v505
    %551 = vmatprep.subr.mxu0 0.0
    %552 = vmatpush1.msra.mxu0 %v504
    %553 = vmatprep.subr.mxu0 0.0
    %554 = vmatpush1.msra.mxu0 %v503
    %555 = vmatprep.subr.mxu0 0.0
    %556 = vmatpush1.msra.mxu0 %v502
    %557 = vmatprep.subr.mxu0 0.0
    %558 = vmatpush1.msra.mxu0 %v501
    %559 = vmatprep.subr.mxu0 0.0
    %560 = vmatpush1.msra.mxu0 %v500
    %561 = vmatprep.subr.mxu0 0.0
    %562 = vmatpush1.msra.mxu0 %v499
    %563 = vmatprep.subr.mxu0 0.0
    %564 = vmatpush1.msra.mxu0 %v498
    %565 = vmatprep.subr.mxu0 0.0
    %566 = vmatpush1.msra.mxu0 %v497
    %567 = vmatprep.subr.mxu0 0.0
    %568 = vmatpush1.msra.mxu0 %v496
    %569 = vmatprep.subr.mxu0 0.0
    %570 = vmatpush1.msra.mxu0 %v495
    %571 = vmatprep.subr.mxu0 0.0
    %572 = vmatpush2.msra.mxu0 0.0
    %573 = vmatprep.subr.mxu0 0.0
    %574 = vmatpush2.msra.mxu0 0.0
    %575 = vmatprep.subr.mxu0 0.0
    %576 = vmatpush2.msra.mxu0 0.0
    %577 = vmatprep.subr.mxu0 0.0
    %578 = vmatpush2.msra.mxu0 0.0
    %579 = vmatprep.subr.mxu0 0.0
    %580 = vmatpush2.msra.mxu0 0.0
    %581 = vmatprep.subr.mxu0 0.0
    %582 = vmatpush2.msra.mxu0 0.0
    %583 = vmatprep.subr.mxu0 0.0
    %584 = vmatpush2.msra.mxu0 0.0
    %585 = vmatprep.subr.mxu0 0.0
    %586 = vmatpush2.msra.mxu0 0.0
    %587 = vmatprep.subr.mxu0 0.0
    %588 = vmatpush2.msra.mxu0 0.0
    %589 = vmatprep.subr.mxu0 0.0
    %590 = vmatpush2.msra.mxu0 0.0
    %591 = vmatprep.subr.mxu0 0.0
    %592 = vmatpush2.msra.mxu0 0.0
    %593 = vmatprep.subr.mxu0 0.0
    %594 = vmatpush2.msra.mxu0 0.0
    %595 = vmatprep.subr.mxu0 0.0
    %596 = vmatpush2.msra.mxu0 0.0
    %597 = vmatprep.subr.mxu0 0.0
    %598 = vmatpush2.msra.mxu0 0.0
    %599 = vmatprep.subr.mxu0 0.0
    %600 = vmatpush2.msra.mxu0 0.0
    %601 = vmatprep.subr.mxu0 0.0
    %602 = vmatpush2.msra.mxu0 0.0
    %603 = vmatprep.mubr.f32.mxu0 0.0
    %604 = vmatmul.mubr.f32.gmra.mxu0 %v516
    %v605 = vpop.f32.mrf.mxu0
    %v606 = vadd.f32 %v512, %v605
    %v607 = vpop.f32.mrf.mxu0
    %608 = vmatprep.mubr.f32.mxu0 0.0
    %609 = vmatmul.mubr.f32.gmra.mxu0 %v519
    %v610 = vpop.f32.mrf.mxu0
    %v611 = vadd.f32 %v512, %v610
    %v612 = vpop.f32.mrf.mxu0
    %613 = vmatprep.mubr.f32.mxu0 0.0
    %614 = vmatmul.mubr.f32.gmra.mxu0 %v522
    %v615 = vpop.f32.mrf.mxu0
    %v616 = vadd.f32 %v512, %v615
    %v617 = vpop.f32.mrf.mxu0
    %618 = vmatprep.mubr.f32.mxu0 0.0
    %619 = vmatmul.mubr.f32.gmra.mxu0 %v525
    %v620 = vpop.f32.mrf.mxu0
    %v621 = vadd.f32 %v512, %v620
    %v622 = vpop.f32.mrf.mxu0
    %623 = vmatprep.mubr.f32.mxu0 0.0
    %624 = vmatmul.mubr.f32.gmra.mxu0 %v528
    %v625 = vpop.f32.mrf.mxu0
    %v626 = vadd.f32 %v512, %v625
    %v627 = vpop.f32.mrf.mxu0
    %628 = vmatprep.mubr.f32.mxu0 0.0
    %629 = vmatmul.mubr.f32.gmra.mxu0 %v531
    %v630 = vpop.f32.mrf.mxu0
    %v631 = vadd.f32 %v512, %v630
    %v632 = vpop.f32.mrf.mxu0
    %633 = vmatprep.mubr.f32.mxu0 0.0
    %634 = vmatmul.mubr.f32.gmra.mxu0 %v534
    %v635 = vpop.f32.mrf.mxu0
    %v636 = vadd.f32 %v512, %v635
    %v637 = vpop.f32.mrf.mxu0
    %638 = vmatprep.mubr.f32.mxu0 0.0
    %639 = vmatmul.mubr.f32.gmra.mxu0 %v537
    %v640 = vpop.f32.mrf.mxu0
    %v641 = vadd.f32 %v512, %v640
    %v642 = vpop.f32.mrf.mxu0
    %643 = vdwg.mxu0
    %v644 = vmax.f32 %v606, 0.0
    %v645 = vmax.f32 %v611, 0.0
    %v646 = vmax.f32 %v616, 0.0
    %v647 = vmax.f32 %v621, 0.0
    %v648 = vmax.f32 %v626, 0.0
    %v649 = vmax.f32 %v631, 0.0
    %v650 = vmax.f32 %v636, 0.0
    %v651 = vmax.f32 %v641, 0.0
    %v652 = vsel %vm67, %v644, -inf
    %v653 = vsel %vm67, %v645, -inf
    %v654 = vmax.f32 %v652, %v653
    %v655 = vrot.slane %v654, 4
    %v656 = vmax.f32 %v654, %v655
    %v657 = vrot.slane %v656, 2
    %v658 = vmax.f32 %v656, %v657
    %v659 = vrot.slane %v658, 1
    %v660 = vmax.f32 %v658, %v659
    %v661 = vsel %vm67, %v646, -inf
    %v662 = vsel %vm67, %v647, -inf
    %v663 = vmax.f32 %v661, %v662
    %v664 = vrot.slane %v663, 4
    %v665 = vmax.f32 %v663, %v664
    %v666 = vrot.slane %v665, 2
    %v667 = vmax.f32 %v665, %v666
    %v668 = vrot.slane %v667, 1
    %v669 = vmax.f32 %v667, %v668
    %v670 = vsel %vm67, %v648, -inf
    %v671 = vsel %vm67, %v649, -inf
    %v672 = vmax.f32 %v670, %v671
    %v673 = vrot.slane %v672, 4
    %v674 = vmax.f32 %v672, %v673
    %v675 = vrot.slane %v674, 2
    %v676 = vmax.f32 %v674, %v675
    %v677 = vrot.slane %v676, 1
    %v678 = vmax.f32 %v676, %v677
    %v679 = vsel %vm67, %v650, -inf
    %v680 = vsel %vm67, %v651, -inf
    %v681 = vmax.f32 %v679, %v680
    %v682 = vrot.slane %v681, 4
    %v683 = vmax.f32 %v681, %v682
    %v684 = vrot.slane %v683, 2
    %v685 = vmax.f32 %v683, %v684
    %v686 = vrot.slane %v685, 1
    %v687 = vmax.f32 %v685, %v686
    %vm692 = vcmask 1041409
    %v693 = vsel %vm692, %v669, %v660
    %vm694 = vcmask 1042434
    %v695 = vsel %vm694, %v678, %v693
    %vm696 = vcmask 1043459
    %v697 = vsel %vm696, %v687, %v695
    %vm699 = vcmask 257024
    %700 = vst.msk [vmem:[#allocation2] sm:$0xf] %vm699, %v697
    // Predicated region
    $region26: #{tpu_custom_call.1} parent=1 // pred_check
      _
    $region27: #{tpu_custom_call.1} parent=1 // pred_check_branch
      %702 = sbr.rel (0) target = $region29
    $region28: #{tpu_custom_call.1} parent=1 // pred_region
      %s704 = ssub.s32 64, 64
      %705 = vsyncadd [#allocation3], %s704
      %s707 = sshll.u32 [#allocation2], 4
      %s708 = int_to_ptr.vmem [resolvable:$true] %s707
      %710 = dma.vmem_to_hbm [thread:$0]  %s708, 64, %s6, [#allocation3]
    $region29: #{tpu_custom_call.1} parent=1 // pred_fallthru
      _
    // Predicated region
    $region30: #{tpu_custom_call.1} parent=1 // pred_check
      _
    $region31: #{tpu_custom_call.1} parent=1 // pred_check_branch
      %712 = sbr.rel (0) target = $region33
    $region32: #{tpu_custom_call.1} parent=1 // pred_region
      %713 = dma.done [#allocation3], 64
    $region33: #{tpu_custom_call.1} parent=1 // pred_fallthru
      _
    %714 = vsyncpa [#allocation3], 1

</llo_original>
